<compile_context>
chip_gen: v7x
topology: tpu7x:2x2x1
jax: 0.10.0
libtpu: 0.0.40
codegen_flags: <defaults>
</compile_context>

<pallas_src>
import functools

import jax
import jax.numpy as jnp
from jax import lax
from jax.experimental import pallas as pl
from jax.experimental.pallas import tpu as pltpu


def _bilinear_matrix(out_size, in_size):
    """(out_size, in_size) 1-D interpolation matrix, bilinear align_corners=True."""
    if in_size == 1:
        return jnp.ones((out_size, 1), jnp.float32)
    i = jnp.arange(out_size, dtype=jnp.float32)
    src = i * (in_size - 1) / (out_size - 1)
    lo = jnp.clip(jnp.floor(src), 0, in_size - 2).astype(jnp.int32)
    frac = src - lo.astype(jnp.float32)
    rows = jnp.arange(out_size)
    a = jnp.zeros((out_size, in_size), jnp.float32)
    a = a.at[rows, lo].add(1.0 - frac)
    a = a.at[rows, lo + 1].add(frac)
    return a


def _expand_conv_rows(w_hwio, W):
    """3x3 conv weights (3, 3, Cin, Cout) -> banded row-matmul weights.

    Returns (3, W*Cin, W*Cout): one row-flat (channels fastest) input row
    matmul'd against tap dy of this produces a full output row (lane-dense
    W*Cout).  Output pixel w, tap dx reads input pixel w + dx - 1;
    out-of-range taps are dropped == zero padding along W.
    """
    _, _, cin, cout = w_hwio.shape
    per_dy = []
    for dy in range(3):
        m = jnp.zeros((W, cin, W, cout), jnp.float32)
        for dx in range(3):
            band = jnp.eye(W, W, k=-(dx - 1), dtype=jnp.float32)  # in = out + dx - 1
            m = m + band[:, None, :, None] * w_hwio[dy, dx][None, :, None, :]
        per_dy.append(m.reshape(W * cin, W * cout))
    return jnp.stack(per_dy, axis=0)


def _fold_bn(gamma, beta, running_mean, running_var, eps=1e-5):
    scale = gamma / jnp.sqrt(running_var + eps)
    bias = beta - running_mean * scale
    return scale, bias


def _pick_block_b(n, h, target_m=256):
    """Images per grid step: fill the MXU M dimension up to ~target_m rows."""
    best = 1
    for d in range(1, n + 1):
        if n % d == 0 and d * h <= target_m:
            best = d
    return best


def _huge_up4_kernel(x1_ref, x2p_ref, ahp_ref, w1_ref, w2_ref, b1_ref, b2_ref,
                     o_ref, *, B, H):
    f32 = jnp.float32
    bf16 = jnp.bfloat16
    wm = b1_ref.shape[-1]            # W * cmid

    # ---- build the stage-1 operand: per image, bilinear x4 H-upsample of x1
    #      (conv H zero-pad folded into ahp's zero rows) and the host-H-padded
    #      x2, with the three conv row taps concatenated along K; all B images
    #      of the block are stacked along M (one tall deep dot per stage). ----
    rows = []
    for b in range(B):               # static unroll over the batch block
        # H-upsample as a bf16 MXU matmul (f32 accumulation).  The W-upsample
        # matrix is folded into the stage-1 weights on the host.
        t = jnp.dot(ahp_ref[...], x1_ref[b],
                    preferred_element_type=f32).astype(bf16)        # (H+2, W1*C1)
        x2b = x2p_ref[b]                                            # (H+2, W*C2)
        rows.append(jnp.concatenate(
            [x2b[0:H], x2b[1:H + 1], x2b[2:H + 2],
             t[0:H], t[1:H + 1], t[2:H + 2]], axis=1))
    xcat = rows[0] if B == 1 else jnp.concatenate(rows, axis=0)     # (B*H, K1)

    # ---- stage 1: ONE deep MXU dot; BN scale is folded into the weights, so
    #      the epilogue is just bias + ReLU (full-lane VPU). ----
    acc1 = jnp.dot(xcat, w1_ref[...], preferred_element_type=f32)   # (B*H, W*cmid)
    y1 = jnp.maximum(acc1 + b1_ref[...], 0.0).astype(bf16)

    # ---- stage 2: the mid tensor never leaves VMEM.  Its H zero-padding is
    #      folded directly into the K-concat (one zero row per shifted tap). ----
    zrow = jnp.zeros((1, wm), bf16)
    rows2 = []
    for b in range(B):
        yb = y1[b * H:(b + 1) * H]
        up = jnp.concatenate([zrow, yb[:H - 1]], axis=0)            # tap dy = 0
        dn = jnp.concatenate([yb[1:], zrow], axis=0)                # tap dy = 2
        rows2.append(jnp.concatenate([up, yb, dn], axis=1))
    ycat = rows2[0] if B == 1 else jnp.concatenate(rows2, axis=0)   # (B*H, K2)

    acc2 = jnp.dot(ycat, w2_ref[...], preferred_element_type=f32)   # (B*H, W*cout)
    y2 = jnp.maximum(acc2 + b2_ref[...], 0.0)
    for b in range(B):
        o_ref[b] = y2[b * H:(b + 1) * H].astype(o_ref.dtype)        # lane-dense


def _huge_up4_pallas(x1b, x2p, ahp, w1cat, w2cat, b1, b2, *, block_b, H):
    N, H1, W1C1 = x1b.shape
    _, Hp2, WC2 = x2p.shape
    WO = w2cat.shape[1]
    kernel = functools.partial(_huge_up4_kernel, B=block_b, H=H)
    return pl.pallas_call(
        kernel,
        out_shape=jax.ShapeDtypeStruct((N, H, WO), jnp.float32),
        grid_spec=pltpu.PrefetchScalarGridSpec(
            num_scalar_prefetch=0,
            grid=(N // block_b,),
            in_specs=[
                pl.BlockSpec((block_b, H1, W1C1), lambda n: (n, 0, 0)),
                pl.BlockSpec((block_b, Hp2, WC2), lambda n: (n, 0, 0)),
                # Grid-invariant operands (constant index_map).
                # TODO(synk): for genuinely huge configs, single-buffer these
                # (pipeline_mode=pl.Buffered(1)) to halve their footprint on
                # v7x's 64 MiB VMEM; they are tiny (<200 KiB total) here.
                pl.BlockSpec(ahp.shape, lambda n: (0, 0)),
                pl.BlockSpec(w1cat.shape, lambda n: (0, 0)),
                pl.BlockSpec(w2cat.shape, lambda n: (0, 0)),
                pl.BlockSpec(b1.shape, lambda n: (0, 0)),
                pl.BlockSpec(b2.shape, lambda n: (0, 0)),
            ],
            out_specs=pl.BlockSpec((block_b, H, WO), lambda n: (n, 0, 0)),
        ),
        compiler_params=pltpu.CompilerParams(
            dimension_semantics=("parallel",),
            vmem_limit_bytes=32 * 1024 * 1024),
    )(x1b, x2p, ahp, w1cat, w2cat, b1, b2)


class HugeUp4Pallas:
    """Upsample(x4, bilinear, align_corners=True) -> cat([x2, x1]) -> DoubleConv."""

    def __init__(self, in_channels, out_channels, bilinear=True, key=None):
        if not bilinear:
            # TODO(synk): bilinear=False (ConvTranspose2d up-path) not implemented.
            raise NotImplementedError("only bilinear=True is supported")
        self.in_channels = in_channels
        self.out_channels = out_channels
        self.mid_channels = in_channels // 2
        mid = self.mid_channels

        if key is None:
            key = jax.random.PRNGKey(0)
        k1, k2, k3, k4, k5, k6 = jax.random.split(key, 6)

        # Conv weights, PyTorch (Cout, Cin, 3, 3) -> HWIO (3, 3, Cin, Cout).
        w1_oihw = jax.random.normal(k1, (mid, in_channels, 3, 3), jnp.float32) * 0.1
        w2_oihw = jax.random.normal(k2, (out_channels, mid, 3, 3), jnp.float32) * 0.1
        self.w1_hwio = jnp.transpose(w1_oihw, (2, 3, 1, 0))
        self.w2_hwio = jnp.transpose(w2_oihw, (2, 3, 1, 0))

        # BatchNorm params, eval-mode fold (running stats at PyTorch defaults).
        # TODO(synk): training-mode BatchNorm (batch statistics) not implemented.
        g1 = 1.0 + 0.1 * jax.random.normal(k3, (mid,), jnp.float32)
        b1 = 0.1 * jax.random.normal(k4, (mid,), jnp.float32)
        g2 = 1.0 + 0.1 * jax.random.normal(k5, (out_channels,), jnp.float32)
        b2 = 0.1 * jax.random.normal(k6, (out_channels,), jnp.float32)
        self.scale1, self.bias1 = _fold_bn(
            g1, b1, jnp.zeros((mid,), jnp.float32), jnp.ones((mid,), jnp.float32))
        self.scale2, self.bias2 = _fold_bn(
            g2, b2, jnp.zeros((out_channels,), jnp.float32),
            jnp.ones((out_channels,), jnp.float32))

    @functools.partial(jax.jit, static_argnums=0)
    def __call__(self, x1_nchw, x2_nchw):
        N, C1, H1, W1 = x1_nchw.shape
        N2, C2, H, W = x2_nchw.shape
        assert N2 == N and H == 4 * H1 and W == 4 * W1
        assert C1 + C2 == self.in_channels
        cmid, cout = self.mid_channels, self.out_channels

        # NCHW -> row-flat NHWC (N, H, W*C): channels fastest, so a whole image
        # row maps densely onto the 128-wide lane axis.  bf16 MXU operands.
        # TODO(synk): at realistic sizes accept/emit NHWC at the module
        # boundary instead of transposing around the kernel.
        x1_flat = jnp.transpose(x1_nchw, (0, 2, 3, 1)).reshape(N, H1, W1 * C1)
        x1_flat = x1_flat.astype(jnp.bfloat16)
        x2_flat = jnp.transpose(x2_nchw, (0, 2, 3, 1)).reshape(N, H, W * C2)
        # x2's conv H zero-padding done once on the host (no in-kernel pad concat).
        x2p = jnp.pad(x2_flat, ((0, 0), (1, 1), (0, 0))).astype(jnp.bfloat16)

        # Bilinear (align_corners=True) x4 upsample as constant matrices; the
        # conv's H zero-padding is folded into ahp's first/last zero rows.
        ahp = jnp.pad(_bilinear_matrix(H, H1), ((1, 1), (0, 0)))          # (H+2, H1)
        awe = jnp.kron(_bilinear_matrix(W, W1).T,
                       jnp.eye(C1, dtype=jnp.float32))                    # (W1*C1, W*C1)

        # Banded row-matmul conv weights (f32).  conv1 is split across the
        # [x2, x1_up] concat (conv is linear in its input channels).
        # TODO(synk): W-tiled / dx-im2col variant needed for genuinely huge
        # W*C (the banded weight grows O(W^2*Cin*Cout)).
        wa = _expand_conv_rows(self.w1_hwio[:, :, :C2, :], W)    # (3, W*C2, W*cmid)
        wb = _expand_conv_rows(self.w1_hwio[:, :, C2:, :], W)    # (3, W*C1, W*cmid)
        w2b = _expand_conv_rows(self.w2_hwio, W)                 # (3, W*cmid, W*cout)

        # Fold the W-upsample matrix into the x1-branch weights: the x1
        # contraction depth drops from W*C1 to W1*C1 and awe never ships.
        wbw = jnp.einsum("uk,dko->duo", awe, wb)                 # (3, W1*C1, W*cmid)

        # Fold the BN scale into the weight columns in f32, then cast once to
        # bf16; only bias + ReLU remain in the kernel epilogue.
        s1t = jnp.tile(self.scale1, W)                           # (W*cmid,)
        s2t = jnp.tile(self.scale2, W)                           # (W*cout,)
        wa = wa * s1t[None, None, :]
        wbw = wbw * s1t[None, None, :]
        w2b = w2b * s2t[None, None, :]

        # Stack the three row taps along K -> ONE deep MXU dot per stage.
        # Order must match the kernel's operand concat.
        w1cat = jnp.concatenate([wa[0], wa[1], wa[2], wbw[0], wbw[1], wbw[2]],
                                axis=0).astype(jnp.bfloat16)     # (3*(W*C2+W1*C1), W*cmid)
        w2cat = jnp.concatenate([w2b[0], w2b[1], w2b[2]],
                                axis=0).astype(jnp.bfloat16)     # (3*W*cmid, W*cout)

        b1 = jnp.tile(self.bias1, W).reshape(1, W * cmid)        # f32 epilogue bias
        b2 = jnp.tile(self.bias2, W).reshape(1, W * cout)

        # Output lane width W*cout is a multiple of 128 for the demo shape
        # (unmasked vst writeback).  block_b images are stacked along M per step.
        block_b = _pick_block_b(N, H)
        y = _huge_up4_pallas(x1_flat, x2p, ahp.astype(jnp.bfloat16),
                             w1cat, w2cat, b1, b2, block_b=block_b, H=H)
        # (N, H, W*Cout) -> NHWC (free bitcast) -> NCHW (PyTorch layout).
        return jnp.transpose(y.reshape(N, H, W, cout), (0, 3, 1, 2))


if __name__ == "__main__":
    key = jax.random.PRNGKey(0)
    k_x1, k_x2, k_p = jax.random.split(key, 3)

    N = 2
    in_channels, out_channels = 8, 8
    C1 = in_channels // 2          # channels of x1 (before upsample)
    C2 = in_channels - C1          # channels of the skip tensor x2
    H1 = W1 = 4                    # x1 spatial; x2 is 4x larger
    H = W = 4 * H1

    x1 = jax.random.normal(k_x1, (N, C1, H1, W1), jnp.float32)
    x2 = jax.random.normal(k_x2, (N, C2, H, W), jnp.float32)

    model = HugeUp4Pallas(in_channels, out_channels, bilinear=True, key=k_p)
    out = jax.block_until_ready(model(x1, x2))

    # Pure-JAX f32 reference with the same semantics (independent formulation).
    def ref_forward(x1_nchw, x2_nchw):
        ah = _bilinear_matrix(H, H1)
        aw = _bilinear_matrix(W, W1)
        x1_up = jnp.einsum("ah,bw,nchw->ncab", ah, aw, x1_nchw)
        x = jnp.concatenate([x2_nchw, x1_up], axis=1)        # cat([x2, x1], dim=1)
        xh = jnp.transpose(x, (0, 2, 3, 1))

        def block(xh, w, s, b):
            y = lax.conv_general_dilated(
                xh, w, window_strides=(1, 1), padding="SAME",
                dimension_numbers=("NHWC", "HWIO", "NHWC"))
            return jnp.maximum(y * s + b, 0.0)

        yh = block(xh, model.w1_hwio, model.scale1, model.bias1)
        yh = block(yh, model.w2_hwio, model.scale2, model.bias2)
        return jnp.transpose(yh, (0, 3, 1, 2))

    ref = ref_forward(x1, x2)
    assert out.shape == (N, out_channels, H, W), out.shape
    max_err = float(jnp.max(jnp.abs(out - ref)))
    assert jnp.allclose(out, ref, atol=3e-2, rtol=3e-2), max_err

    print("KERNEL_OK")
</pallas_src>

<mosaic_0001>
module attributes {stable_mosaic.version = 11 : i64} {
  func.func private @main(%arg0: i32) attributes {dimension_semantics = [#tpu.dimension_semantics<core_parallel>], iteration_bounds = array<i64: 2>, tpu.core_type = #tpu.core_type<sc_scalar_subcore>, window_params = []} {
    return
  }
}

module attributes {stable_mosaic.version = 11 : i64} {
  func.func private @main(%arg0: i32) attributes {dimension_semantics = [#tpu.dimension_semantics<core_parallel>], iteration_bounds = array<i64: 2>, tpu.core_type = #tpu.core_type<sc_scalar_subcore>, window_params = []} {
    return
  }
}

module attributes {stable_mosaic.version = 11 : i64} {
  func.func @_huge_up4_kernel(%arg0: i32, %arg1: memref<2x4x16xbf16, #tpu.memory_space<vmem>>, %arg2: memref<2x18x64xbf16, #tpu.memory_space<vmem>>, %arg3: memref<18x4xbf16, #tpu.memory_space<vmem>>, %arg4: memref<240x64xbf16, #tpu.memory_space<vmem>>, %arg5: memref<192x128xbf16, #tpu.memory_space<vmem>>, %arg6: memref<1x64xf32, #tpu.memory_space<vmem>>, %arg7: memref<1x128xf32, #tpu.memory_space<vmem>>, %arg8: memref<2x16x128xf32, #tpu.memory_space<vmem>>) attributes {dimension_semantics = [#tpu.dimension_semantics<parallel>], iteration_bounds = array<i64: 1>, scalar_prefetch = 0 : i64, scratch_operands = 0 : i64, tpu.core_type = #tpu.core_type<tc>, window_params = [{transform_indices = @transform_0, window_bounds = array<i64: 2, 4, 16>}, {transform_indices = @transform_1, window_bounds = array<i64: 2, 18, 64>}, {pipeline_mode = #tpu.pipeline_mode<synchronous>, transform_indices = @transform_2, window_bounds = array<i64: 18, 4>}, {pipeline_mode = #tpu.pipeline_mode<synchronous>, transform_indices = @transform_3, window_bounds = array<i64: 240, 64>}, {pipeline_mode = #tpu.pipeline_mode<synchronous>, transform_indices = @transform_4, window_bounds = array<i64: 192, 128>}, {pipeline_mode = #tpu.pipeline_mode<synchronous>, transform_indices = @transform_5, window_bounds = array<i64: 1, 64>}, {pipeline_mode = #tpu.pipeline_mode<synchronous>, transform_indices = @transform_6, window_bounds = array<i64: 1, 128>}, {transform_indices = @transform_7, window_bounds = array<i64: 2, 16, 128>}]} {
    %c0 = arith.constant 0 : index
    %c0_0 = arith.constant 0 : index
    %0 = vector.load %arg3[%c0, %c0_0] : memref<18x4xbf16, #tpu.memory_space<vmem>>, vector<18x4xbf16>
    %c0_1 = arith.constant 0 : index
    %c0_2 = arith.constant 0 : index
    %c0_3 = arith.constant 0 : index
    %1 = vector.load %arg1[%c0_1, %c0_2, %c0_3] : memref<2x4x16xbf16, #tpu.memory_space<vmem>>, vector<1x4x16xbf16>
    %2 = vector.shape_cast %1 : vector<1x4x16xbf16> to vector<4x16xbf16>
    %cst = arith.constant dense<0.000000e+00> : vector<18x16xf32>
    %3 = tpu.matmul %0, %2, %cst {dimension_numbers = #tpu.dot_dimension_numbers<[1], [0], [0], [1], [0, 0, 1, 1], [], []>} : vector<18x4xbf16>, vector<4x16xbf16>, vector<18x16xf32> -> vector<18x16xf32>
    %4 = arith.truncf %3 : vector<18x16xf32> to vector<18x16xbf16>
    %c0_4 = arith.constant 0 : index
    %c0_5 = arith.constant 0 : index
    %c0_6 = arith.constant 0 : index
    %5 = vector.load %arg2[%c0_4, %c0_5, %c0_6] : memref<2x18x64xbf16, #tpu.memory_space<vmem>>, vector<1x18x64xbf16>
    %6 = vector.shape_cast %5 : vector<1x18x64xbf16> to vector<18x64xbf16>
    %7 = vector.extract_strided_slice %6 {offsets = [0, 0], sizes = [16, 64], strides = [1, 1]} : vector<18x64xbf16> to vector<16x64xbf16>
    %8 = vector.extract_strided_slice %6 {offsets = [1, 0], sizes = [16, 64], strides = [1, 1]} : vector<18x64xbf16> to vector<16x64xbf16>
    %9 = vector.extract_strided_slice %6 {offsets = [2, 0], sizes = [16, 64], strides = [1, 1]} : vector<18x64xbf16> to vector<16x64xbf16>
    %10 = vector.extract_strided_slice %4 {offsets = [0, 0], sizes = [16, 16], strides = [1, 1]} : vector<18x16xbf16> to vector<16x16xbf16>
    %11 = vector.extract_strided_slice %4 {offsets = [1, 0], sizes = [16, 16], strides = [1, 1]} : vector<18x16xbf16> to vector<16x16xbf16>
    %12 = vector.extract_strided_slice %4 {offsets = [2, 0], sizes = [16, 16], strides = [1, 1]} : vector<18x16xbf16> to vector<16x16xbf16>
    %13 = tpu.concatenate %7, %8, %9, %10, %11, %12 in 1 : vector<16x64xbf16>, vector<16x64xbf16>, vector<16x64xbf16>, vector<16x16xbf16>, vector<16x16xbf16>, vector<16x16xbf16> -> vector<16x240xbf16>
    %c0_7 = arith.constant 0 : index
    %c0_8 = arith.constant 0 : index
    %14 = vector.load %arg3[%c0_7, %c0_8] : memref<18x4xbf16, #tpu.memory_space<vmem>>, vector<18x4xbf16>
    %c1 = arith.constant 1 : index
    %c0_9 = arith.constant 0 : index
    %c0_10 = arith.constant 0 : index
    %15 = vector.load %arg1[%c1, %c0_9, %c0_10] : memref<2x4x16xbf16, #tpu.memory_space<vmem>>, vector<1x4x16xbf16>
    %16 = vector.shape_cast %15 : vector<1x4x16xbf16> to vector<4x16xbf16>
    %cst_11 = arith.constant dense<0.000000e+00> : vector<18x16xf32>
    %17 = tpu.matmul %14, %16, %cst_11 {dimension_numbers = #tpu.dot_dimension_numbers<[1], [0], [0], [1], [0, 0, 1, 1], [], []>} : vector<18x4xbf16>, vector<4x16xbf16>, vector<18x16xf32> -> vector<18x16xf32>
    %18 = arith.truncf %17 : vector<18x16xf32> to vector<18x16xbf16>
    %c1_12 = arith.constant 1 : index
    %c0_13 = arith.constant 0 : index
    %c0_14 = arith.constant 0 : index
    %19 = vector.load %arg2[%c1_12, %c0_13, %c0_14] : memref<2x18x64xbf16, #tpu.memory_space<vmem>>, vector<1x18x64xbf16>
    %20 = vector.shape_cast %19 : vector<1x18x64xbf16> to vector<18x64xbf16>
    %21 = vector.extract_strided_slice %20 {offsets = [0, 0], sizes = [16, 64], strides = [1, 1]} : vector<18x64xbf16> to vector<16x64xbf16>
    %22 = vector.extract_strided_slice %20 {offsets = [1, 0], sizes = [16, 64], strides = [1, 1]} : vector<18x64xbf16> to vector<16x64xbf16>
    %23 = vector.extract_strided_slice %20 {offsets = [2, 0], sizes = [16, 64], strides = [1, 1]} : vector<18x64xbf16> to vector<16x64xbf16>
    %24 = vector.extract_strided_slice %18 {offsets = [0, 0], sizes = [16, 16], strides = [1, 1]} : vector<18x16xbf16> to vector<16x16xbf16>
    %25 = vector.extract_strided_slice %18 {offsets = [1, 0], sizes = [16, 16], strides = [1, 1]} : vector<18x16xbf16> to vector<16x16xbf16>
    %26 = vector.extract_strided_slice %18 {offsets = [2, 0], sizes = [16, 16], strides = [1, 1]} : vector<18x16xbf16> to vector<16x16xbf16>
    %27 = tpu.concatenate %21, %22, %23, %24, %25, %26 in 1 : vector<16x64xbf16>, vector<16x64xbf16>, vector<16x64xbf16>, vector<16x16xbf16>, vector<16x16xbf16>, vector<16x16xbf16> -> vector<16x240xbf16>
    %28 = tpu.concatenate %13, %27 in 0 : vector<16x240xbf16>, vector<16x240xbf16> -> vector<32x240xbf16>
    %c0_15 = arith.constant 0 : index
    %c0_16 = arith.constant 0 : index
    %29 = vector.load %arg4[%c0_15, %c0_16] : memref<240x64xbf16, #tpu.memory_space<vmem>>, vector<240x64xbf16>
    %cst_17 = arith.constant dense<0.000000e+00> : vector<32x64xf32>
    %30 = tpu.matmul %28, %29, %cst_17 {dimension_numbers = #tpu.dot_dimension_numbers<[1], [0], [0], [1], [0, 0, 1, 1], [], []>} : vector<32x240xbf16>, vector<240x64xbf16>, vector<32x64xf32> -> vector<32x64xf32>
    %c0_18 = arith.constant 0 : index
    %c0_19 = arith.constant 0 : index
    %31 = vector.load %arg6[%c0_18, %c0_19] : memref<1x64xf32, #tpu.memory_space<vmem>>, vector<1x64xf32>
    %32 = vector.broadcast %31 : vector<1x64xf32> to vector<32x64xf32>
    %33 = arith.addf %30, %32 : vector<32x64xf32>
    %cst_20 = arith.constant 0.000000e+00 : f32
    %34 = vector.broadcast %cst_20 : f32 to vector<32x64xf32>
    %35 = arith.maximumf %33, %34 : vector<32x64xf32>
    %36 = arith.truncf %35 : vector<32x64xf32> to vector<32x64xbf16>
    %cst_21 = arith.constant 0.000000e+00 : bf16
    %37 = vector.broadcast %cst_21 : bf16 to vector<1x64xbf16>
    %38 = vector.extract_strided_slice %36 {offsets = [0, 0], sizes = [16, 64], strides = [1, 1]} : vector<32x64xbf16> to vector<16x64xbf16>
    %39 = vector.extract_strided_slice %38 {offsets = [0, 0], sizes = [15, 64], strides = [1, 1]} : vector<16x64xbf16> to vector<15x64xbf16>
    %40 = tpu.concatenate %37, %39 in 0 : vector<1x64xbf16>, vector<15x64xbf16> -> vector<16x64xbf16>
    %41 = vector.extract_strided_slice %38 {offsets = [1, 0], sizes = [15, 64], strides = [1, 1]} : vector<16x64xbf16> to vector<15x64xbf16>
    %42 = tpu.concatenate %41, %37 in 0 : vector<15x64xbf16>, vector<1x64xbf16> -> vector<16x64xbf16>
    %43 = tpu.concatenate %40, %38, %42 in 1 : vector<16x64xbf16>, vector<16x64xbf16>, vector<16x64xbf16> -> vector<16x192xbf16>
    %44 = vector.extract_strided_slice %36 {offsets = [16, 0], sizes = [16, 64], strides = [1, 1]} : vector<32x64xbf16> to vector<16x64xbf16>
    %45 = vector.extract_strided_slice %44 {offsets = [0, 0], sizes = [15, 64], strides = [1, 1]} : vector<16x64xbf16> to vector<15x64xbf16>
    %46 = tpu.concatenate %37, %45 in 0 : vector<1x64xbf16>, vector<15x64xbf16> -> vector<16x64xbf16>
    %47 = vector.extract_strided_slice %44 {offsets = [1, 0], sizes = [15, 64], strides = [1, 1]} : vector<16x64xbf16> to vector<15x64xbf16>
    %48 = tpu.concatenate %47, %37 in 0 : vector<15x64xbf16>, vector<1x64xbf16> -> vector<16x64xbf16>
    %49 = tpu.concatenate %46, %44, %48 in 1 : vector<16x64xbf16>, vector<16x64xbf16>, vector<16x64xbf16> -> vector<16x192xbf16>
    %50 = tpu.concatenate %43, %49 in 0 : vector<16x192xbf16>, vector<16x192xbf16> -> vector<32x192xbf16>
    %c0_22 = arith.constant 0 : index
    %c0_23 = arith.constant 0 : index
    %51 = vector.load %arg5[%c0_22, %c0_23] : memref<192x128xbf16, #tpu.memory_space<vmem>>, vector<192x128xbf16>
    %cst_24 = arith.constant dense<0.000000e+00> : vector<32x128xf32>
    %52 = tpu.matmul %50, %51, %cst_24 {dimension_numbers = #tpu.dot_dimension_numbers<[1], [0], [0], [1], [0, 0, 1, 1], [], []>} : vector<32x192xbf16>, vector<192x128xbf16>, vector<32x128xf32> -> vector<32x128xf32>
    %c0_25 = arith.constant 0 : index
    %c0_26 = arith.constant 0 : index
    %53 = vector.load %arg7[%c0_25, %c0_26] : memref<1x128xf32, #tpu.memory_space<vmem>>, vector<1x128xf32>
    %54 = vector.broadcast %53 : vector<1x128xf32> to vector<32x128xf32>
    %55 = arith.addf %52, %54 : vector<32x128xf32>
    %cst_27 = arith.constant 0.000000e+00 : f32
    %56 = vector.broadcast %cst_27 : f32 to vector<32x128xf32>
    %57 = arith.maximumf %55, %56 : vector<32x128xf32>
    %58 = vector.extract_strided_slice %57 {offsets = [0, 0], sizes = [16, 128], strides = [1, 1]} : vector<32x128xf32> to vector<16x128xf32>
    %c0_28 = arith.constant 0 : index
    %c0_29 = arith.constant 0 : index
    %c0_30 = arith.constant 0 : index
    %59 = vector.load %arg8[%c0_28, %c0_29, %c0_30] : memref<2x16x128xf32, #tpu.memory_space<vmem>>, vector<1x16x128xf32>
    %60 = vector.shape_cast %59 : vector<1x16x128xf32> to vector<16x128xf32>
    %61 = vector.shape_cast %58 : vector<16x128xf32> to vector<1x16x128xf32>
    tpu.vector_store %arg8[%c0_28, %c0_29, %c0_30], %61 {strides = array<i32>} : memref<2x16x128xf32, #tpu.memory_space<vmem>>, vector<1x16x128xf32>,
    %62 = vector.extract_strided_slice %57 {offsets = [16, 0], sizes = [16, 128], strides = [1, 1]} : vector<32x128xf32> to vector<16x128xf32>
    %c1_31 = arith.constant 1 : index
    %c0_32 = arith.constant 0 : index
    %c0_33 = arith.constant 0 : index
    %63 = vector.load %arg8[%c1_31, %c0_32, %c0_33] : memref<2x16x128xf32, #tpu.memory_space<vmem>>, vector<1x16x128xf32>
    %64 = vector.shape_cast %63 : vector<1x16x128xf32> to vector<16x128xf32>
    %65 = vector.shape_cast %62 : vector<16x128xf32> to vector<1x16x128xf32>
    tpu.vector_store %arg8[%c1_31, %c0_32, %c0_33], %65 {strides = array<i32>} : memref<2x16x128xf32, #tpu.memory_space<vmem>>, vector<1x16x128xf32>,
    return
  }
  func.func @transform_0(%arg0: i32) -> (i32, i32, i32) {
    %c0_i32 = arith.constant 0 : i32
    %c0_i32_0 = arith.constant 0 : i32
    %c0_i32_1 = arith.constant 0 : i32
    return %arg0, %c0_i32, %c0_i32_0 : i32, i32, i32
  }
  func.func @transform_1(%arg0: i32) -> (i32, i32, i32) {
    %c0_i32 = arith.constant 0 : i32
    %c0_i32_0 = arith.constant 0 : i32
    %c0_i32_1 = arith.constant 0 : i32
    return %arg0, %c0_i32, %c0_i32_0 : i32, i32, i32
  }
  func.func @transform_2(%arg0: i32) -> (i32, i32) {
    %c0_i32 = arith.constant 0 : i32
    %c0_i32_0 = arith.constant 0 : i32
    %c0_i32_1 = arith.constant 0 : i32
    return %c0_i32, %c0_i32_0 : i32, i32
  }
  func.func @transform_3(%arg0: i32) -> (i32, i32) {
    %c0_i32 = arith.constant 0 : i32
    %c0_i32_0 = arith.constant 0 : i32
    %c0_i32_1 = arith.constant 0 : i32
    return %c0_i32, %c0_i32_0 : i32, i32
  }
  func.func @transform_4(%arg0: i32) -> (i32, i32) {
    %c0_i32 = arith.constant 0 : i32
    %c0_i32_0 = arith.constant 0 : i32
    %c0_i32_1 = arith.constant 0 : i32
    return %c0_i32, %c0_i32_0 : i32, i32
  }
  func.func @transform_5(%arg0: i32) -> (i32, i32) {
    %c0_i32 = arith.constant 0 : i32
    %c0_i32_0 = arith.constant 0 : i32
    %c0_i32_1 = arith.constant 0 : i32
    return %c0_i32, %c0_i32_0 : i32, i32
  }
  func.func @transform_6(%arg0: i32) -> (i32, i32) {
    %c0_i32 = arith.constant 0 : i32
    %c0_i32_0 = arith.constant 0 : i32
    %c0_i32_1 = arith.constant 0 : i32
    return %c0_i32, %c0_i32_0 : i32, i32
  }
  func.func @transform_7(%arg0: i32) -> (i32, i32, i32) {
    %c0_i32 = arith.constant 0 : i32
    %c0_i32_0 = arith.constant 0 : i32
    %c0_i32_1 = arith.constant 0 : i32
    return %arg0, %c0_i32, %c0_i32_0 : i32, i32, i32
  }
}

</mosaic_0001>

<llo_original>
// kernel: tile.19
$region0: #{tile.19}
  #allocation0 [shape = 's32[1]{0}', space=sflag, size = 0x4, scoped, tag = 'scoped memory for tile.19']
  %s0 = inlined_call_operand.vmem [shape: f32[4], index: 0, kind: input, shape index: {}]
  %s1 = inlined_call_operand.vmem [shape: f32[16,4], index: 1, kind: output, shape index: {}]
  // Predicated region
  $region2: #{tile.19} parent=0 // pred_check
    _
  $region3: #{tile.19} parent=0 // pred_check_branch
    %3 = sbr.rel (0) target = $region5
  $region4: #{tile.19} parent=0 // pred_region
    _
  $region5: #{tile.19} parent=0 // pred_fallthru
    _
  %v4 = vld [vmem:[%s0] ss:$0 sm:$0xff]
  %5 = vst [vmem:[%s1] sm:$0xff] %v4
  %s6 = scalar_lea.vmem %s1, 8
  %7 = vst [vmem:[%s6] sm:$0xff] %v4

// kernel: mul.409
$region0: #{mul.409}
  %s0 = inlined_call_operand.vmem [shape: f32[16,4], index: 0, kind: input, shape index: {}]
  %s1 = inlined_call_operand.vmem [shape: f32[64], index: 1, kind: output, shape index: {}]
  $region1: #{mul.409} parent=0
    #allocation0 [shape = 'u8[4096]{0}', space=vmem, size = 0x1000, scoped, tag = 'scoped mem for output reshape']
    %v2 = vld [vmem:[%s0] sm:$0x1]
    %vm3 = vcmask 31744
    %4 = vst.msk [vmem:[#allocation0] sm:$0x1] %vm3, %v2
    %s5 = scalar_lea.vmem %s0, 15
    %v6 = vld [vmem:[%s5] sm:$0x1]
    %7 = vrot.lane.b32.xlu0 %v6, 60
    %v8 = vpop.permute.xlu0 %7
    %vm9 = vcmask 523744
    %10 = vst.msk [vmem:[#allocation0] sm:$0x1] %vm9, %v8
    %s11 = scalar_lea.vmem %s0, 14
    %v12 = vld [vmem:[%s11] sm:$0x1]
    %13 = vrot.lane.b32.xlu0 %v12, 56
    %v14 = vpop.permute.xlu0 %13
    %vm15 = vcmask 490944
    %16 = vst.msk [vmem:[#allocation0] sm:$0x1] %vm15, %v14
    %s17 = scalar_lea.vmem %s0, 13
    %v18 = vld [vmem:[%s17] sm:$0x1]
    %19 = vrot.lane.b32.xlu0 %v18, 52
    %v20 = vpop.permute.xlu0 %19
    %vm21 = vcmask 458144
    %22 = vst.msk [vmem:[#allocation0] sm:$0x1] %vm21, %v20
    %s23 = scalar_lea.vmem %s0, 12
    %v24 = vld [vmem:[%s23] sm:$0x1]
    %25 = vrot.lane.b32.xlu0 %v24, 48
    %v26 = vpop.permute.xlu0 %25
    %vm27 = vcmask 425344
    %28 = vst.msk [vmem:[#allocation0] sm:$0x1] %vm27, %v26
    %s29 = scalar_lea.vmem %s0, 11
    %v30 = vld [vmem:[%s29] sm:$0x1]
    %31 = vrot.lane.b32.xlu0 %v30, 44
    %v32 = vpop.permute.xlu0 %31
    %vm33 = vcmask 392544
    %34 = vst.msk [vmem:[#allocation0] sm:$0x1] %vm33, %v32
    %s35 = scalar_lea.vmem %s0, 10
    %v36 = vld [vmem:[%s35] sm:$0x1]
    %37 = vrot.lane.b32.xlu0 %v36, 40
    %v38 = vpop.permute.xlu0 %37
    %vm39 = vcmask 359744
    %40 = vst.msk [vmem:[#allocation0] sm:$0x1] %vm39, %v38
    %s41 = scalar_lea.vmem %s0, 9
    %v42 = vld [vmem:[%s41] sm:$0x1]
    %43 = vrot.lane.b32.xlu0 %v42, 36
    %v44 = vpop.permute.xlu0 %43
    %vm45 = vcmask 326944
    %46 = vst.msk [vmem:[#allocation0] sm:$0x1] %vm45, %v44
    %s47 = scalar_lea.vmem %s0, 8
    %v48 = vld [vmem:[%s47] sm:$0x1]
    %49 = vrot.lane.b32.xlu0 %v48, 32
    %v50 = vpop.permute.xlu0 %49
    %vm51 = vcmask 294144
    %52 = vst.msk [vmem:[#allocation0] sm:$0x1] %vm51, %v50
    %s53 = scalar_lea.vmem %s0, 7
    %v54 = vld [vmem:[%s53] sm:$0x1]
    %55 = vrot.lane.b32.xlu0 %v54, 28
    %v56 = vpop.permute.xlu0 %55
    %vm57 = vcmask 261344
    %58 = vst.msk [vmem:[#allocation0] sm:$0x1] %vm57, %v56
    %s59 = scalar_lea.vmem %s0, 6
    %v60 = vld [vmem:[%s59] sm:$0x1]
    %61 = vrot.lane.b32.xlu0 %v60, 24
    %v62 = vpop.permute.xlu0 %61
    %vm63 = vcmask 228544
    %64 = vst.msk [vmem:[#allocation0] sm:$0x1] %vm63, %v62
    %s65 = scalar_lea.vmem %s0, 5
    %v66 = vld [vmem:[%s65] sm:$0x1]
    %67 = vrot.lane.b32.xlu0 %v66, 20
    %v68 = vpop.permute.xlu0 %67
    %vm69 = vcmask 195744
    %70 = vst.msk [vmem:[#allocation0] sm:$0x1] %vm69, %v68
    %s71 = scalar_lea.vmem %s0, 4
    %v72 = vld [vmem:[%s71] sm:$0x1]
    %73 = vrot.lane.b32.xlu0 %v72, 16
    %v74 = vpop.permute.xlu0 %73
    %vm75 = vcmask 162944
    %76 = vst.msk [vmem:[#allocation0] sm:$0x1] %vm75, %v74
    %s77 = scalar_lea.vmem %s0, 3
    %v78 = vld [vmem:[%s77] sm:$0x1]
    %79 = vrot.lane.b32.xlu0 %v78, 12
    %v80 = vpop.permute.xlu0 %79
    %vm81 = vcmask 130144
    %82 = vst.msk [vmem:[#allocation0] sm:$0x1] %vm81, %v80
    %s83 = scalar_lea.vmem %s0, 2
    %v84 = vld [vmem:[%s83] sm:$0x1]
    %85 = vrot.lane.b32.xlu0 %v84, 8
    %v86 = vpop.permute.xlu0 %85
    %vm87 = vcmask 97344
    %88 = vst.msk [vmem:[#allocation0] sm:$0x1] %vm87, %v86
    %s89 = scalar_lea.vmem %s0, 1
    %v90 = vld [vmem:[%s89] sm:$0x1]
    %91 = vrot.lane.b32.xlu0 %v90, 4
    %v92 = vpop.permute.xlu0 %91
    %vm93 = vcmask 64544
    %94 = vst.msk [vmem:[#allocation0] sm:$0x1] %vm93, %v92
    %s96 = sshllo.u32 0, 1
    %v98 = vld [vmem:[#allocation0] sm:%s96]
    %s99 = sshllo.u32 0, 1
    %100 = vst [vmem:[%s1] sm:%s99] %v98

// kernel: tile.22
$region0: #{tile.22}
  #allocation0 [shape = 's32[1]{0}', space=sflag, size = 0x4, scoped, tag = 'scoped memory for tile.22']
  %s0 = inlined_call_operand.vmem [shape: f32[8], index: 0, kind: input, shape index: {}]
  %s1 = inlined_call_operand.vmem [shape: f32[16,8], index: 1, kind: output, shape index: {}]
  // Predicated region
  $region2: #{tile.22} parent=0 // pred_check
    _
  $region3: #{tile.22} parent=0 // pred_check_branch
    %3 = sbr.rel (0) target = $region5
  $region4: #{tile.22} parent=0 // pred_region
    _
  $region5: #{tile.22} parent=0 // pred_fallthru
    _
  %v4 = vld [vmem:[%s0] ss:$0 sm:$0xff]
  %5 = vst [vmem:[%s1] sm:$0xff] %v4
  %s6 = scalar_lea.vmem %s1, 8
  %7 = vst [vmem:[%s6] sm:$0xff] %v4

// kernel: mul.417
$region0: #{mul.417}
  %s0 = inlined_call_operand.vmem [shape: f32[16,8], index: 0, kind: input, shape index: {}]
  %s1 = inlined_call_operand.vmem [shape: f32[128], index: 1, kind: output, shape index: {}]
  $region1: #{mul.417} parent=0
    #allocation0 [shape = 'u8[4096]{0}', space=vmem, size = 0x1000, scoped, tag = 'scoped mem for output reshape']
    %v2 = vld [vmem:[%s0] sm:$0x1]
    %vm3 = vcmask 64512
    %4 = vst.msk [vmem:[#allocation0] sm:$0x1] %vm3, %v2
    %s5 = scalar_lea.vmem %s0, 15
    %v6 = vld [vmem:[%s5] sm:$0x1]
    %7 = vrot.lane.b32.xlu0 %v6, 120
    %v8 = vpop.permute.xlu0 %7
    %vm9 = vcmask 1048512
    %10 = vst.msk [vmem:[#allocation0] sm:$0x1] %vm9, %v8
    %s11 = scalar_lea.vmem %s0, 14
    %v12 = vld [vmem:[%s11] sm:$0x1]
    %13 = vrot.lane.b32.xlu0 %v12, 112
    %v14 = vpop.permute.xlu0 %13
    %vm15 = vcmask 982912
    %16 = vst.msk [vmem:[#allocation0] sm:$0x1] %vm15, %v14
    %s17 = scalar_lea.vmem %s0, 13
    %v18 = vld [vmem:[%s17] sm:$0x1]
    %19 = vrot.lane.b32.xlu0 %v18, 104
    %v20 = vpop.permute.xlu0 %19
    %vm21 = vcmask 917312
    %22 = vst.msk [vmem:[#allocation0] sm:$0x1] %vm21, %v20
    %s23 = scalar_lea.vmem %s0, 12
    %v24 = vld [vmem:[%s23] sm:$0x1]
    %25 = vrot.lane.b32.xlu0 %v24, 96
    %v26 = vpop.permute.xlu0 %25
    %vm27 = vcmask 851712
    %28 = vst.msk [vmem:[#allocation0] sm:$0x1] %vm27, %v26
    %s29 = scalar_lea.vmem %s0, 11
    %v30 = vld [vmem:[%s29] sm:$0x1]
    %31 = vrot.lane.b32.xlu0 %v30, 88
    %v32 = vpop.permute.xlu0 %31
    %vm33 = vcmask 786112
    %34 = vst.msk [vmem:[#allocation0] sm:$0x1] %vm33, %v32
    %s35 = scalar_lea.vmem %s0, 10
    %v36 = vld [vmem:[%s35] sm:$0x1]
    %37 = vrot.lane.b32.xlu0 %v36, 80
    %v38 = vpop.permute.xlu0 %37
    %vm39 = vcmask 720512
    %40 = vst.msk [vmem:[#allocation0] sm:$0x1] %vm39, %v38
    %s41 = scalar_lea.vmem %s0, 9
    %v42 = vld [vmem:[%s41] sm:$0x1]
    %43 = vrot.lane.b32.xlu0 %v42, 72
    %v44 = vpop.permute.xlu0 %43
    %vm45 = vcmask 654912
    %46 = vst.msk [vmem:[#allocation0] sm:$0x1] %vm45, %v44
    %s47 = scalar_lea.vmem %s0, 8
    %v48 = vld [vmem:[%s47] sm:$0x1]
    %49 = vrot.lane.b32.xlu0 %v48, 64
    %v50 = vpop.permute.xlu0 %49
    %vm51 = vcmask 589312
    %52 = vst.msk [vmem:[#allocation0] sm:$0x1] %vm51, %v50
    %s53 = scalar_lea.vmem %s0, 7
    %v54 = vld [vmem:[%s53] sm:$0x1]
    %55 = vrot.lane.b32.xlu0 %v54, 56
    %v56 = vpop.permute.xlu0 %55
    %vm57 = vcmask 523712
    %58 = vst.msk [vmem:[#allocation0] sm:$0x1] %vm57, %v56
    %s59 = scalar_lea.vmem %s0, 6
    %v60 = vld [vmem:[%s59] sm:$0x1]
    %61 = vrot.lane.b32.xlu0 %v60, 48
    %v62 = vpop.permute.xlu0 %61
    %vm63 = vcmask 458112
    %64 = vst.msk [vmem:[#allocation0] sm:$0x1] %vm63, %v62
    %s65 = scalar_lea.vmem %s0, 5
    %v66 = vld [vmem:[%s65] sm:$0x1]
    %67 = vrot.lane.b32.xlu0 %v66, 40
    %v68 = vpop.permute.xlu0 %67
    %vm69 = vcmask 392512
    %70 = vst.msk [vmem:[#allocation0] sm:$0x1] %vm69, %v68
    %s71 = scalar_lea.vmem %s0, 4
    %v72 = vld [vmem:[%s71] sm:$0x1]
    %73 = vrot.lane.b32.xlu0 %v72, 32
    %v74 = vpop.permute.xlu0 %73
    %vm75 = vcmask 326912
    %76 = vst.msk [vmem:[#allocation0] sm:$0x1] %vm75, %v74
    %s77 = scalar_lea.vmem %s0, 3
    %v78 = vld [vmem:[%s77] sm:$0x1]
    %79 = vrot.lane.b32.xlu0 %v78, 24
    %v80 = vpop.permute.xlu0 %79
    %vm81 = vcmask 261312
    %82 = vst.msk [vmem:[#allocation0] sm:$0x1] %vm81, %v80
    %s83 = scalar_lea.vmem %s0, 2
    %v84 = vld [vmem:[%s83] sm:$0x1]
    %85 = vrot.lane.b32.xlu0 %v84, 16
    %v86 = vpop.permute.xlu0 %85
    %vm87 = vcmask 195712
    %88 = vst.msk [vmem:[#allocation0] sm:$0x1] %vm87, %v86
    %s89 = scalar_lea.vmem %s0, 1
    %v90 = vld [vmem:[%s89] sm:$0x1]
    %91 = vrot.lane.b32.xlu0 %v90, 8
    %v92 = vpop.permute.xlu0 %91
    %vm93 = vcmask 130112
    %94 = vst.msk [vmem:[#allocation0] sm:$0x1] %vm93, %v92
    %s96 = sshllo.u32 0, 1
    %v98 = vld [vmem:[#allocation0] sm:%s96]
    %s99 = sshllo.u32 0, 1
    %100 = vst [vmem:[%s1] sm:%s99] %v98

// kernel: tile.29
$region0: #{tile.29}
  %s0 = inlined_call_operand.vmem [shape: f32[16,4], index: 0, kind: input, shape index: {}]
  %s1 = inlined_call_operand.vmem [shape: f32[1,64], index: 1, kind: output, shape index: {}]
  $region1: #{tile.29} parent=0
    #allocation0 [shape = 'u8[4096]{0}', space=vmem, size = 0x1000, scoped, tag = 'scoped mem for output reshape']
    %v2 = vld [vmem:[%s0] sm:$0x1]
    %vm3 = vcmask 31744
    %4 = vst.msk [vmem:[#allocation0] sm:$0x1] %vm3, %v2
    %s5 = scalar_lea.vmem %s0, 15
    %v6 = vld [vmem:[%s5] sm:$0x1]
    %7 = vrot.lane.b32.xlu0 %v6, 60
    %v8 = vpop.permute.xlu0 %7
    %vm9 = vcmask 523744
    %10 = vst.msk [vmem:[#allocation0] sm:$0x1] %vm9, %v8
    %s11 = scalar_lea.vmem %s0, 14
    %v12 = vld [vmem:[%s11] sm:$0x1]
    %13 = vrot.lane.b32.xlu0 %v12, 56
    %v14 = vpop.permute.xlu0 %13
    %vm15 = vcmask 490944
    %16 = vst.msk [vmem:[#allocation0] sm:$0x1] %vm15, %v14
    %s17 = scalar_lea.vmem %s0, 13
    %v18 = vld [vmem:[%s17] sm:$0x1]
    %19 = vrot.lane.b32.xlu0 %v18, 52
    %v20 = vpop.permute.xlu0 %19
    %vm21 = vcmask 458144
    %22 = vst.msk [vmem:[#allocation0] sm:$0x1] %vm21, %v20
    %s23 = scalar_lea.vmem %s0, 12
    %v24 = vld [vmem:[%s23] sm:$0x1]
    %25 = vrot.lane.b32.xlu0 %v24, 48
    %v26 = vpop.permute.xlu0 %25
    %vm27 = vcmask 425344
    %28 = vst.msk [vmem:[#allocation0] sm:$0x1] %vm27, %v26
    %s29 = scalar_lea.vmem %s0, 11
    %v30 = vld [vmem:[%s29] sm:$0x1]
    %31 = vrot.lane.b32.xlu0 %v30, 44
    %v32 = vpop.permute.xlu0 %31
    %vm33 = vcmask 392544
    %34 = vst.msk [vmem:[#allocation0] sm:$0x1] %vm33, %v32
    %s35 = scalar_lea.vmem %s0, 10
    %v36 = vld [vmem:[%s35] sm:$0x1]
    %37 = vrot.lane.b32.xlu0 %v36, 40
    %v38 = vpop.permute.xlu0 %37
    %vm39 = vcmask 359744
    %40 = vst.msk [vmem:[#allocation0] sm:$0x1] %vm39, %v38
    %s41 = scalar_lea.vmem %s0, 9
    %v42 = vld [vmem:[%s41] sm:$0x1]
    %43 = vrot.lane.b32.xlu0 %v42, 36
    %v44 = vpop.permute.xlu0 %43
    %vm45 = vcmask 326944
    %46 = vst.msk [vmem:[#allocation0] sm:$0x1] %vm45, %v44
    %s47 = scalar_lea.vmem %s0, 8
    %v48 = vld [vmem:[%s47] sm:$0x1]
    %49 = vrot.lane.b32.xlu0 %v48, 32
    %v50 = vpop.permute.xlu0 %49
    %vm51 = vcmask 294144
    %52 = vst.msk [vmem:[#allocation0] sm:$0x1] %vm51, %v50
    %s53 = scalar_lea.vmem %s0, 7
    %v54 = vld [vmem:[%s53] sm:$0x1]
    %55 = vrot.lane.b32.xlu0 %v54, 28
    %v56 = vpop.permute.xlu0 %55
    %vm57 = vcmask 261344
    %58 = vst.msk [vmem:[#allocation0] sm:$0x1] %vm57, %v56
    %s59 = scalar_lea.vmem %s0, 6
    %v60 = vld [vmem:[%s59] sm:$0x1]
    %61 = vrot.lane.b32.xlu0 %v60, 24
    %v62 = vpop.permute.xlu0 %61
    %vm63 = vcmask 228544
    %64 = vst.msk [vmem:[#allocation0] sm:$0x1] %vm63, %v62
    %s65 = scalar_lea.vmem %s0, 5
    %v66 = vld [vmem:[%s65] sm:$0x1]
    %67 = vrot.lane.b32.xlu0 %v66, 20
    %v68 = vpop.permute.xlu0 %67
    %vm69 = vcmask 195744
    %70 = vst.msk [vmem:[#allocation0] sm:$0x1] %vm69, %v68
    %s71 = scalar_lea.vmem %s0, 4
    %v72 = vld [vmem:[%s71] sm:$0x1]
    %73 = vrot.lane.b32.xlu0 %v72, 16
    %v74 = vpop.permute.xlu0 %73
    %vm75 = vcmask 162944
    %76 = vst.msk [vmem:[#allocation0] sm:$0x1] %vm75, %v74
    %s77 = scalar_lea.vmem %s0, 3
    %v78 = vld [vmem:[%s77] sm:$0x1]
    %79 = vrot.lane.b32.xlu0 %v78, 12
    %v80 = vpop.permute.xlu0 %79
    %vm81 = vcmask 130144
    %82 = vst.msk [vmem:[#allocation0] sm:$0x1] %vm81, %v80
    %s83 = scalar_lea.vmem %s0, 2
    %v84 = vld [vmem:[%s83] sm:$0x1]
    %85 = vrot.lane.b32.xlu0 %v84, 8
    %v86 = vpop.permute.xlu0 %85
    %vm87 = vcmask 97344
    %88 = vst.msk [vmem:[#allocation0] sm:$0x1] %vm87, %v86
    %s89 = scalar_lea.vmem %s0, 1
    %v90 = vld [vmem:[%s89] sm:$0x1]
    %91 = vrot.lane.b32.xlu0 %v90, 4
    %v92 = vpop.permute.xlu0 %91
    %vm93 = vcmask 64544
    %94 = vst.msk [vmem:[#allocation0] sm:$0x1] %vm93, %v92
    %s96 = sshllo.u32 0, 1
    %v98 = vld [vmem:[#allocation0] sm:%s96]
    %s99 = sshllo.u32 0, 1
    %100 = vst [vmem:[%s1] sm:%s99] %v98

// kernel: tile.33
$region0: #{tile.33}
  %s0 = inlined_call_operand.vmem [shape: f32[16,8], index: 0, kind: input, shape index: {}]
  %s1 = inlined_call_operand.vmem [shape: f32[1,128], index: 1, kind: output, shape index: {}]
  $region1: #{tile.33} parent=0
    #allocation0 [shape = 'u8[4096]{0}', space=vmem, size = 0x1000, scoped, tag = 'scoped mem for output reshape']
    %v2 = vld [vmem:[%s0] sm:$0x1]
    %vm3 = vcmask 64512
    %4 = vst.msk [vmem:[#allocation0] sm:$0x1] %vm3, %v2
    %s5 = scalar_lea.vmem %s0, 15
    %v6 = vld [vmem:[%s5] sm:$0x1]
    %7 = vrot.lane.b32.xlu0 %v6, 120
    %v8 = vpop.permute.xlu0 %7
    %vm9 = vcmask 1048512
    %10 = vst.msk [vmem:[#allocation0] sm:$0x1] %vm9, %v8
    %s11 = scalar_lea.vmem %s0, 14
    %v12 = vld [vmem:[%s11] sm:$0x1]
    %13 = vrot.lane.b32.xlu0 %v12, 112
    %v14 = vpop.permute.xlu0 %13
    %vm15 = vcmask 982912
    %16 = vst.msk [vmem:[#allocation0] sm:$0x1] %vm15, %v14
    %s17 = scalar_lea.vmem %s0, 13
    %v18 = vld [vmem:[%s17] sm:$0x1]
    %19 = vrot.lane.b32.xlu0 %v18, 104
    %v20 = vpop.permute.xlu0 %19
    %vm21 = vcmask 917312
    %22 = vst.msk [vmem:[#allocation0] sm:$0x1] %vm21, %v20
    %s23 = scalar_lea.vmem %s0, 12
    %v24 = vld [vmem:[%s23] sm:$0x1]
    %25 = vrot.lane.b32.xlu0 %v24, 96
    %v26 = vpop.permute.xlu0 %25
    %vm27 = vcmask 851712
    %28 = vst.msk [vmem:[#allocation0] sm:$0x1] %vm27, %v26
    %s29 = scalar_lea.vmem %s0, 11
    %v30 = vld [vmem:[%s29] sm:$0x1]
    %31 = vrot.lane.b32.xlu0 %v30, 88
    %v32 = vpop.permute.xlu0 %31
    %vm33 = vcmask 786112
    %34 = vst.msk [vmem:[#allocation0] sm:$0x1] %vm33, %v32
    %s35 = scalar_lea.vmem %s0, 10
    %v36 = vld [vmem:[%s35] sm:$0x1]
    %37 = vrot.lane.b32.xlu0 %v36, 80
    %v38 = vpop.permute.xlu0 %37
    %vm39 = vcmask 720512
    %40 = vst.msk [vmem:[#allocation0] sm:$0x1] %vm39, %v38
    %s41 = scalar_lea.vmem %s0, 9
    %v42 = vld [vmem:[%s41] sm:$0x1]
    %43 = vrot.lane.b32.xlu0 %v42, 72
    %v44 = vpop.permute.xlu0 %43
    %vm45 = vcmask 654912
    %46 = vst.msk [vmem:[#allocation0] sm:$0x1] %vm45, %v44
    %s47 = scalar_lea.vmem %s0, 8
    %v48 = vld [vmem:[%s47] sm:$0x1]
    %49 = vrot.lane.b32.xlu0 %v48, 64
    %v50 = vpop.permute.xlu0 %49
    %vm51 = vcmask 589312
    %52 = vst.msk [vmem:[#allocation0] sm:$0x1] %vm51, %v50
    %s53 = scalar_lea.vmem %s0, 7
    %v54 = vld [vmem:[%s53] sm:$0x1]
    %55 = vrot.lane.b32.xlu0 %v54, 56
    %v56 = vpop.permute.xlu0 %55
    %vm57 = vcmask 523712
    %58 = vst.msk [vmem:[#allocation0] sm:$0x1] %vm57, %v56
    %s59 = scalar_lea.vmem %s0, 6
    %v60 = vld [vmem:[%s59] sm:$0x1]
    %61 = vrot.lane.b32.xlu0 %v60, 48
    %v62 = vpop.permute.xlu0 %61
    %vm63 = vcmask 458112
    %64 = vst.msk [vmem:[#allocation0] sm:$0x1] %vm63, %v62
    %s65 = scalar_lea.vmem %s0, 5
    %v66 = vld [vmem:[%s65] sm:$0x1]
    %67 = vrot.lane.b32.xlu0 %v66, 40
    %v68 = vpop.permute.xlu0 %67
    %vm69 = vcmask 392512
    %70 = vst.msk [vmem:[#allocation0] sm:$0x1] %vm69, %v68
    %s71 = scalar_lea.vmem %s0, 4
    %v72 = vld [vmem:[%s71] sm:$0x1]
    %73 = vrot.lane.b32.xlu0 %v72, 32
    %v74 = vpop.permute.xlu0 %73
    %vm75 = vcmask 326912
    %76 = vst.msk [vmem:[#allocation0] sm:$0x1] %vm75, %v74
    %s77 = scalar_lea.vmem %s0, 3
    %v78 = vld [vmem:[%s77] sm:$0x1]
    %79 = vrot.lane.b32.xlu0 %v78, 24
    %v80 = vpop.permute.xlu0 %79
    %vm81 = vcmask 261312
    %82 = vst.msk [vmem:[#allocation0] sm:$0x1] %vm81, %v80
    %s83 = scalar_lea.vmem %s0, 2
    %v84 = vld [vmem:[%s83] sm:$0x1]
    %85 = vrot.lane.b32.xlu0 %v84, 16
    %v86 = vpop.permute.xlu0 %85
    %vm87 = vcmask 195712
    %88 = vst.msk [vmem:[#allocation0] sm:$0x1] %vm87, %v86
    %s89 = scalar_lea.vmem %s0, 1
    %v90 = vld [vmem:[%s89] sm:$0x1]
    %91 = vrot.lane.b32.xlu0 %v90, 8
    %v92 = vpop.permute.xlu0 %91
    %vm93 = vcmask 130112
    %94 = vst.msk [vmem:[#allocation0] sm:$0x1] %vm93, %v92
    %s96 = sshllo.u32 0, 1
    %v98 = vld [vmem:[#allocation0] sm:%s96]
    %s99 = sshllo.u32 0, 1
    %100 = vst [vmem:[%s1] sm:%s99] %v98

// kernel: a_call__.1
$region0: #{a_call__.1}
  #allocation0 [shape = 'u32[]', space=smem, size = 0x4, offset = 0x4, fixed_abs, tag = 'smem constant byte address 0x4 - core index']
  #allocation1 [shape = 'u32[144,128]{1,0:T(1,128)}', space=vmem, size = 0x12000, scoped, tag = 'internal scratch']
  %s0 = inlined_call_operand.vmem [shape: bf16[2,4,16], index: 0, kind: input, shape index: {}]
  %s1 = inlined_call_operand.vmem [shape: bf16[2,18,64], index: 1, kind: input, shape index: {}]
  %s2 = inlined_call_operand.vmem [shape: bf16[18,4], index: 2, kind: input, shape index: {}]
  %s3 = inlined_call_operand.vmem [shape: bf16[240,64], index: 3, kind: input, shape index: {}]
  %s4 = inlined_call_operand.vmem [shape: bf16[192,128], index: 4, kind: input, shape index: {}]
  %s5 = inlined_call_operand.vmem [shape: f32[1,64], index: 5, kind: input, shape index: {}]
  %s6 = inlined_call_operand.vmem [shape: f32[1,128], index: 6, kind: input, shape index: {}]
  %s7 = inlined_call_operand.vmem [shape: f32[2,16,128], index: 7, kind: output, shape index: {}]
  %s8 = sld [smem:[#allocation0]]
  $region38: #{a_call__.1} parent=0
    _
  %s10 = ssub.s32 1, %s8
  %s11 = scalar_select 0, %s10, %s8
  // Predicated region
  $region2: #{a_call__.1} parent=0 // pred_check
    _
  $region3: #{a_call__.1} parent=0 // pred_check_branch
    %13 = sbr.rel (0) target = $region5
  $region4: #{a_call__.1} parent=0 // pred_region
    _
  $region5: #{a_call__.1} parent=0 // pred_fallthru
    _
  // Predicated region
  $region6: #{a_call__.1} parent=0 // pred_check
    _
  $region7: #{a_call__.1} parent=0 // pred_check_branch
    %15 = sbr.rel (0) target = $region9
  $region8: #{a_call__.1} parent=0 // pred_region
    _
  $region9: #{a_call__.1} parent=0 // pred_fallthru
    _
  // Predicated region
  $region10: #{a_call__.1} parent=0 // pred_check
    _
  $region11: #{a_call__.1} parent=0 // pred_check_branch
    %17 = sbr.rel (0) target = $region13
  $region12: #{a_call__.1} parent=0 // pred_region
    _
  $region13: #{a_call__.1} parent=0 // pred_fallthru
    _
  // Predicated region
  $region14: #{a_call__.1} parent=0 // pred_check
    _
  $region15: #{a_call__.1} parent=0 // pred_check_branch
    %19 = sbr.rel (0) target = $region17
  $region16: #{a_call__.1} parent=0 // pred_region
    _
  $region17: #{a_call__.1} parent=0 // pred_fallthru
    _
  // Predicated region
  $region18: #{a_call__.1} parent=0 // pred_check
    _
  $region19: #{a_call__.1} parent=0 // pred_check_branch
    %21 = sbr.rel (0) target = $region21
  $region20: #{a_call__.1} parent=0 // pred_region
    _
  $region21: #{a_call__.1} parent=0 // pred_fallthru
    _
  // Predicated region
  $region22: #{a_call__.1} parent=0 // pred_check
    _
  $region23: #{a_call__.1} parent=0 // pred_check_branch
    %23 = sbr.rel (0) target = $region25
  $region24: #{a_call__.1} parent=0 // pred_region
    _
  $region25: #{a_call__.1} parent=0 // pred_fallthru
    _
  // Predicated region
  $region26: #{a_call__.1} parent=0 // pred_check
    _
  $region27: #{a_call__.1} parent=0 // pred_check_branch
    %25 = sbr.rel (0) target = $region29
  $region28: #{a_call__.1} parent=0 // pred_region
    _
  $region29: #{a_call__.1} parent=0 // pred_fallthru
    _
  %v27 = vld [vmem:[%s2] sm:$0xf]
  %v28 = vld [vmem:[%s2 + $0x4] sm:$0xf]
  %v29 = vld [vmem:[%s2 + $0x8] sm:$0x1]
  %v30 = vld [vmem:[%s0] sm:$0x3]
  %v34 = vunpack.c.l.b16 %v27
  %v35 = vunpack.c.l.b16 %v28
  %v36 = vunpack.c.l.b16 %v29
  %v37 = vpack.c.b16 %v35, %v34
  %v38 = vpack.c.b16 %v36, %v36
  %vm39 = vcmask 31744
  %v41 = vsel %vm39, %v37, 0
  %v44 = vsel %vm39, %v38, 0
  %vm46 = vcmask 1041408
  %v48 = vsel %vm46, %v30, 0
  %50 = vmatprep.subr.bf16.mxu0 0
  %51 = vmatpush1.bf16.msra.mxu0 %v48
  %52 = vmatprep.subr.bf16.mxu0 0
  %53 = vmatpush1.bf16.msra.mxu0 0
  %54 = vmatprep.subr.bf16.mxu0 0
  %55 = vmatpush1.bf16.msra.mxu0 0
  %56 = vmatprep.subr.bf16.mxu0 0
  %57 = vmatpush1.bf16.msra.mxu0 0
  %58 = vmatprep.subr.bf16.mxu0 0
  %59 = vmatpush1.bf16.msra.mxu0 0
  %60 = vmatprep.subr.bf16.mxu0 0
  %61 = vmatpush1.bf16.msra.mxu0 0
  %62 = vmatprep.subr.bf16.mxu0 0
  %63 = vmatpush1.bf16.msra.mxu0 0
  %64 = vmatprep.subr.bf16.mxu0 0
  %65 = vmatpush1.bf16.msra.mxu0 0
  %66 = vmatprep.subr.bf16.mxu0 0
  %67 = vmatpush1.bf16.msra.mxu0 0
  %68 = vmatprep.subr.bf16.mxu0 0
  %69 = vmatpush1.bf16.msra.mxu0 0
  %70 = vmatprep.subr.bf16.mxu0 0
  %71 = vmatpush1.bf16.msra.mxu0 0
  %72 = vmatprep.subr.bf16.mxu0 0
  %73 = vmatpush1.bf16.msra.mxu0 0
  %74 = vmatprep.subr.bf16.mxu0 0
  %75 = vmatpush1.bf16.msra.mxu0 0
  %76 = vmatprep.subr.bf16.mxu0 0
  %77 = vmatpush1.bf16.msra.mxu0 0
  %78 = vmatprep.subr.bf16.mxu0 0
  %79 = vmatpush1.bf16.msra.mxu0 0
  %80 = vmatprep.subr.bf16.mxu0 0
  %81 = vmatpush1.bf16.msra.mxu0 0
  %82 = vmatprep.mubr.bf16.mxu0 0
  %83 = vmatmul.mubr.bf16.gmra.mrb[0].mxu0 %v41
  %v84 = vpop.f32.mrb[0].mxu0
  %v85 = vadd.f32 0.0, %v84
  %v86 = vpop.f32.mrb[0].mxu0
  %v87 = vpop.f32.mrb[0].mxu0
  %v88 = vadd.f32 0.0, %v87
  %v89 = vpop.f32.mrb[0].mxu0
  %90 = vmatprep.mubr.bf16.mxu0 0
  %91 = vmatmul.mubr.bf16.gmra.mrb[0].mxu0 %v44
  %v92 = vpop.f32.mrb[0].mxu0
  %v93 = vadd.f32 0.0, %v92
  %v94 = vpop.f32.mrb[0].mxu0
  %v95 = vpop.f32.mrb[0].mxu0
  %v96 = vpop.f32.mrb[0].mxu0
  %97 = vdwg.mxu0
  %v98 = vpack.c.bf16 %v88, %v85
  %v99 = vpack.c.bf16 %v93, %v93
  %v100 = vld [vmem:[%s1] sm:$0xf]
  %v101 = vld [vmem:[%s1 + $0x4] sm:$0xf]
  %v102 = vld [vmem:[%s1 + $0x8] sm:$0x1]
  %v105 = vunpack.c.l.b16 %v100
  %v106 = vunpack.c.l.b16 %v101
  %v107 = vpack.c.b16 %v106, %v105
  %v109 = vunpack.c.l.b16 %v102
  %v110 = vpack.c.b16 %v109, %v109
  %vm111 = vsmask.f32 7424
  %v113 = vshrl.u32 %v107, 16
  %v115 = vshll.u32 %v107, 16
  %v117 = vrot.slane %v115, 1
  %v118 = vor.u32 %v113, %v117
  %v120 = vshll.u32 %v110, 16
  %v122 = vrot.slane %v120, 1
  %v123 = vsel %vm111, %v118, %v122
  %124 = vrot.lane.b32.xlu0 %v123, 64
  %v125 = vpop.permute.xlu0 %124
  %vm126 = vcmask 1046528
  %v127 = vrot.slane %v107, 1
  %v128 = vrot.slane %v110, 1
  %v129 = vsel %vm126, %v127, %v128
  %131 = vrot.lane.b32.xlu0 %v98, 64
  %v132 = vpop.permute.xlu0 %131
  %v134 = vshrl.u32 %v98, 16
  %v136 = vshll.u32 %v98, 16
  %v138 = vrot.slane %v136, 1
  %v139 = vor.u32 %v134, %v138
  %v141 = vshll.u32 %v99, 16
  %v143 = vrot.slane %v141, 1
  %v144 = vsel %vm111, %v139, %v143
  %145 = vrot.lane.b32.xlu0 %v144, 80
  %v146 = vpop.permute.xlu0 %145
  %v148 = vrot.slane %v98, 1
  %v149 = vrot.slane %v99, 1
  %v150 = vsel %vm126, %v148, %v149
  %151 = vrot.lane.b32.xlu0 %v150, 96
  %v152 = vpop.permute.xlu0 %151
  %vm153 = vcmask 523264
  %v155 = vsel %vm153, %v107, %v125
  %v159 = vsel %vm153, %v129, %v132
  %vm160 = vcmask 654336
  %v162 = vsel %vm160, %v159, %v146
  %vm163 = vcmask 785408
  %v165 = vsel %vm163, %v162, %v152
  %s166 = scalar_lea.vmem %s0, 2
  %v167 = vld [vmem:[%s166] sm:$0x3]
  %v169 = vsel %vm46, %v167, 0
  %171 = vmatprep.subr.bf16.mxu0 0
  %172 = vmatpush1.bf16.msra.mxu0 %v169
  %173 = vmatprep.subr.bf16.mxu0 0
  %174 = vmatpush1.bf16.msra.mxu0 0
  %175 = vmatprep.subr.bf16.mxu0 0
  %176 = vmatpush1.bf16.msra.mxu0 0
  %177 = vmatprep.subr.bf16.mxu0 0
  %178 = vmatpush1.bf16.msra.mxu0 0
  %179 = vmatprep.subr.bf16.mxu0 0
  %180 = vmatpush1.bf16.msra.mxu0 0
  %181 = vmatprep.subr.bf16.mxu0 0
  %182 = vmatpush1.bf16.msra.mxu0 0
  %183 = vmatprep.subr.bf16.mxu0 0
  %184 = vmatpush1.bf16.msra.mxu0 0
  %185 = vmatprep.subr.bf16.mxu0 0
  %186 = vmatpush1.bf16.msra.mxu0 0
  %187 = vmatprep.subr.bf16.mxu0 0
  %188 = vmatpush1.bf16.msra.mxu0 0
  %189 = vmatprep.subr.bf16.mxu0 0
  %190 = vmatpush1.bf16.msra.mxu0 0
  %191 = vmatprep.subr.bf16.mxu0 0
  %192 = vmatpush1.bf16.msra.mxu0 0
  %193 = vmatprep.subr.bf16.mxu0 0
  %194 = vmatpush1.bf16.msra.mxu0 0
  %195 = vmatprep.subr.bf16.mxu0 0
  %196 = vmatpush1.bf16.msra.mxu0 0
  %197 = vmatprep.subr.bf16.mxu0 0
  %198 = vmatpush1.bf16.msra.mxu0 0
  %199 = vmatprep.subr.bf16.mxu0 0
  %200 = vmatpush1.bf16.msra.mxu0 0
  %201 = vmatprep.subr.bf16.mxu0 0
  %202 = vmatpush1.bf16.msra.mxu0 0
  %203 = vmatprep.mubr.bf16.mxu0 0
  %204 = vmatmul.mubr.bf16.gmra.mrb[0].mxu0 %v41
  %v205 = vpop.f32.mrb[0].mxu0
  %v206 = vadd.f32 0.0, %v205
  %v207 = vpop.f32.mrb[0].mxu0
  %v208 = vpop.f32.mrb[0].mxu0
  %v209 = vadd.f32 0.0, %v208
  %v210 = vpop.f32.mrb[0].mxu0
  %211 = vmatprep.mubr.bf16.mxu0 0
  %212 = vmatmul.mubr.bf16.gmra.mrb[0].mxu0 %v44
  %v213 = vpop.f32.mrb[0].mxu0
  %v214 = vadd.f32 0.0, %v213
  %v215 = vpop.f32.mrb[0].mxu0
  %v216 = vpop.f32.mrb[0].mxu0
  %v217 = vpop.f32.mrb[0].mxu0
  %218 = vdwg.mxu0
  %v219 = vpack.c.bf16 %v209, %v206
  %v220 = vpack.c.bf16 %v214, %v214
  %s221 = scalar_lea.vmem %s1, 12
  %v222 = vld [vmem:[%s221] sm:$0xf]
  %v223 = vld [vmem:[%s221 + $0x4] sm:$0xf]
  %v224 = vld [vmem:[%s221 + $0x8] sm:$0x1]
  %v227 = vunpack.c.l.b16 %v222
  %v228 = vunpack.c.l.b16 %v223
  %v229 = vpack.c.b16 %v228, %v227
  %v231 = vunpack.c.l.b16 %v224
  %v232 = vpack.c.b16 %v231, %v231
  %v234 = vshrl.u32 %v229, 16
  %v236 = vshll.u32 %v229, 16
  %v238 = vrot.slane %v236, 1
  %v239 = vor.u32 %v234, %v238
  %v241 = vshll.u32 %v232, 16
  %v243 = vrot.slane %v241, 1
  %v244 = vsel %vm111, %v239, %v243
  %245 = vrot.lane.b32.xlu0 %v244, 64
  %v246 = vpop.permute.xlu0 %245
  %v247 = vrot.slane %v229, 1
  %v248 = vrot.slane %v232, 1
  %v249 = vsel %vm126, %v247, %v248
  %251 = vrot.lane.b32.xlu0 %v219, 64
  %v252 = vpop.permute.xlu0 %251
  %v254 = vshrl.u32 %v219, 16
  %v256 = vshll.u32 %v219, 16
  %v258 = vrot.slane %v256, 1
  %v259 = vor.u32 %v254, %v258
  %v261 = vshll.u32 %v220, 16
  %v263 = vrot.slane %v261, 1
  %v264 = vsel %vm111, %v259, %v263
  %265 = vrot.lane.b32.xlu0 %v264, 80
  %v266 = vpop.permute.xlu0 %265
  %v268 = vrot.slane %v219, 1
  %v269 = vrot.slane %v220, 1
  %v270 = vsel %vm126, %v268, %v269
  %271 = vrot.lane.b32.xlu0 %v270, 96
  %v272 = vpop.permute.xlu0 %271
  %v274 = vsel %vm153, %v229, %v246
  %v278 = vsel %vm153, %v249, %v252
  %v280 = vsel %vm160, %v278, %v266
  %v282 = vsel %vm163, %v280, %v272
  %v283 = vld [vmem:[%s3] sm:$0xf]
  %v284 = vld [vmem:[%s3 + $0x4] sm:$0xf]
  %v285 = vld [vmem:[%s3 + $0x8] sm:$0xf]
  %v286 = vld [vmem:[%s3 + $0xc] sm:$0xf]
  %v287 = vld [vmem:[%s3 + $0x10] sm:$0xf]
  %v288 = vld [vmem:[%s3 + $0x14] sm:$0xf]
  %v289 = vld [vmem:[%s3 + $0x18] sm:$0xf]
  %v290 = vld [vmem:[%s3 + $0x1c] sm:$0xf]
  %v291 = vld [vmem:[%s3 + $0x20] sm:$0xf]
  %v292 = vld [vmem:[%s3 + $0x24] sm:$0xf]
  %v293 = vld [vmem:[%s3 + $0x28] sm:$0xf]
  %v294 = vld [vmem:[%s3 + $0x2c] sm:$0xf]
  %v295 = vld [vmem:[%s3 + $0x30] sm:$0xf]
  %v296 = vld [vmem:[%s3 + $0x34] sm:$0xf]
  %v297 = vld [vmem:[%s3 + $0x38] sm:$0xf]
  %v298 = vld [vmem:[%s3 + $0x3c] sm:$0xf]
  %v299 = vld [vmem:[%s3 + $0x40] sm:$0xf]
  %v300 = vld [vmem:[%s3 + $0x44] sm:$0xf]
  %v301 = vld [vmem:[%s3 + $0x48] sm:$0xf]
  %v302 = vld [vmem:[%s3 + $0x4c] sm:$0xf]
  %v303 = vld [vmem:[%s3 + $0x50] sm:$0xf]
  %v304 = vld [vmem:[%s3 + $0x54] sm:$0xf]
  %v305 = vld [vmem:[%s3 + $0x58] sm:$0xf]
  %v306 = vld [vmem:[%s3 + $0x5c] sm:$0xf]
  %v307 = vld [vmem:[%s3 + $0x60] sm:$0xf]
  %v308 = vld [vmem:[%s3 + $0x64] sm:$0xf]
  %v309 = vld [vmem:[%s3 + $0x68] sm:$0xf]
  %v310 = vld [vmem:[%s3 + $0x6c] sm:$0xf]
  %v311 = vld [vmem:[%s3 + $0x70] sm:$0xf]
  %v312 = vld [vmem:[%s3 + $0x74] sm:$0xf]
  %v313 = vld [vmem:[%s5] sm:$0x1]
  %v315 = vlaneseq
  %v316 = vshrl.u32 %v315, 7
  %v317 = vsub.s32 0, %v316
  %v318 = vrot.slane %v313, %v317
  %v350 = vunpack.c.l.b16 %v283
  %v351 = vunpack.c.l.b16 %v284
  %v352 = vunpack.c.l.b16 %v285
  %v353 = vunpack.c.l.b16 %v286
  %v354 = vunpack.c.l.b16 %v287
  %v355 = vunpack.c.l.b16 %v288
  %v356 = vunpack.c.l.b16 %v289
  %v357 = vunpack.c.l.b16 %v290
  %v358 = vunpack.c.l.b16 %v291
  %v359 = vunpack.c.l.b16 %v292
  %v360 = vunpack.c.l.b16 %v293
  %v361 = vunpack.c.l.b16 %v294
  %v362 = vunpack.c.l.b16 %v295
  %v363 = vunpack.c.l.b16 %v296
  %v364 = vunpack.c.l.b16 %v297
  %v365 = vunpack.c.l.b16 %v298
  %v366 = vunpack.c.l.b16 %v299
  %v367 = vunpack.c.l.b16 %v300
  %v368 = vunpack.c.l.b16 %v301
  %v369 = vunpack.c.l.b16 %v302
  %v370 = vunpack.c.l.b16 %v303
  %v371 = vunpack.c.l.b16 %v304
  %v372 = vunpack.c.l.b16 %v305
  %v373 = vunpack.c.l.b16 %v306
  %v374 = vunpack.c.l.b16 %v307
  %v375 = vunpack.c.l.b16 %v308
  %v376 = vunpack.c.l.b16 %v309
  %v377 = vunpack.c.l.b16 %v310
  %v378 = vunpack.c.l.b16 %v311
  %v379 = vunpack.c.l.b16 %v312
  %v380 = vpack.c.b16 %v351, %v350
  %v381 = vpack.c.b16 %v353, %v352
  %v382 = vpack.c.b16 %v355, %v354
  %v383 = vpack.c.b16 %v357, %v356
  %v384 = vpack.c.b16 %v359, %v358
  %v385 = vpack.c.b16 %v361, %v360
  %v386 = vpack.c.b16 %v363, %v362
  %v387 = vpack.c.b16 %v365, %v364
  %v388 = vpack.c.b16 %v367, %v366
  %v389 = vpack.c.b16 %v369, %v368
  %v390 = vpack.c.b16 %v371, %v370
  %v391 = vpack.c.b16 %v373, %v372
  %v392 = vpack.c.b16 %v375, %v374
  %v393 = vpack.c.b16 %v377, %v376
  %v394 = vpack.c.b16 %v379, %v378
  %vm410 = vcmask 916480
  %v411 = vsel %vm410, %v165, 0
  %v413 = vsel %vm410, %v282, 0
  %415 = vmatprep.subr.bf16.mxu0 0
  %416 = vmatpush1.bf16.msra.mxu0 %v380
  %417 = vmatprep.subr.bf16.mxu0 0
  %418 = vmatpush1.bf16.msra.mxu0 %v381
  %419 = vmatprep.subr.bf16.mxu0 0
  %420 = vmatpush1.bf16.msra.mxu0 %v382
  %421 = vmatprep.subr.bf16.mxu0 0
  %422 = vmatpush1.bf16.msra.mxu0 %v383
  %423 = vmatprep.subr.bf16.mxu0 0
  %424 = vmatpush1.bf16.msra.mxu0 %v384
  %425 = vmatprep.subr.bf16.mxu0 0
  %426 = vmatpush1.bf16.msra.mxu0 %v385
  %427 = vmatprep.subr.bf16.mxu0 0
  %428 = vmatpush1.bf16.msra.mxu0 %v386
  %429 = vmatprep.subr.bf16.mxu0 0
  %430 = vmatpush1.bf16.msra.mxu0 %v387
  %431 = vmatprep.subr.bf16.mxu0 0
  %432 = vmatpush1.bf16.msra.mxu0 %v388
  %433 = vmatprep.subr.bf16.mxu0 0
  %434 = vmatpush1.bf16.msra.mxu0 %v389
  %435 = vmatprep.subr.bf16.mxu0 0
  %436 = vmatpush1.bf16.msra.mxu0 %v390
  %437 = vmatprep.subr.bf16.mxu0 0
  %438 = vmatpush1.bf16.msra.mxu0 %v391
  %439 = vmatprep.subr.bf16.mxu0 0
  %440 = vmatpush1.bf16.msra.mxu0 %v392
  %441 = vmatprep.subr.bf16.mxu0 0
  %442 = vmatpush1.bf16.msra.mxu0 %v393
  %443 = vmatprep.subr.bf16.mxu0 0
  %444 = vmatpush1.bf16.msra.mxu0 %v394
  %445 = vmatprep.subr.bf16.mxu0 0
  %446 = vmatpush1.bf16.msra.mxu0 0
  %447 = vmatprep.mubr.bf16.mxu0 %v411
  %448 = vmatmul.mubr.bf16.gmra.mrb[0].mxu0 %v155
  %v449 = vpop.f32.mrb[0].mxu0
  %v450 = vadd.f32 %v318, %v449
  %v451 = vpop.f32.mrb[0].mxu0
  %v452 = vpop.f32.mrb[0].mxu0
  %v453 = vadd.f32 %v318, %v452
  %v454 = vpop.f32.mrb[0].mxu0
  %455 = vmatprep.mubr.bf16.mxu0 %v413
  %456 = vmatmul.mubr.bf16.gmra.mrb[0].mxu0 %v274
  %v457 = vpop.f32.mrb[0].mxu0
  %v458 = vadd.f32 %v318, %v457
  %v459 = vpop.f32.mrb[0].mxu0
  %v460 = vpop.f32.mrb[0].mxu0
  %v461 = vadd.f32 %v318, %v460
  %v462 = vpop.f32.mrb[0].mxu0
  %463 = vdwg.mxu0
  %v464 = vmax.f32 %v450, 0.0
  %v465 = vmax.f32 %v453, 0.0
  %v466 = vmax.f32 %v458, 0.0
  %v467 = vmax.f32 %v461, 0.0
  %v468 = vpack.c.bf16 %v465, %v464
  %v469 = vpack.c.bf16 %v467, %v466
  %v471 = vshrl.u32 %v468, 16
  %v473 = vrot.slane %v471, 7
  %v474 = vshll.u32 %v468, 16
  %v476 = vor.u32 %v473, %v474
  %vm478 = vcmask 1040384
  %vm479 = vsmask.f32 256
  %vm480 = vmand %vm478, %vm479
  %v481 = vsel %vm480, 0, %v476
  %v482 = vrot.slane %v474, 1
  %v483 = vor.u32 %v471, %v482
  %vm485 = vcmask 1047552
  %vm486 = vmand %vm485, %vm111
  %v487 = vsel %vm486, %v483, 0
  %489 = vrot.lane.b32.xlu0 %v468, 64
  %v490 = vpop.permute.xlu0 %489
  %v493 = vsel %vm153, %v481, %v490
  %v496 = vshrl.u32 %v469, 16
  %v498 = vrot.slane %v496, 7
  %v499 = vshll.u32 %v469, 16
  %v501 = vor.u32 %v498, %v499
  %v503 = vsel %vm480, 0, %v501
  %v504 = vrot.slane %v499, 1
  %v505 = vor.u32 %v496, %v504
  %v507 = vsel %vm486, %v505, 0
  %509 = vrot.lane.b32.xlu0 %v469, 64
  %v510 = vpop.permute.xlu0 %509
  %v513 = vsel %vm153, %v503, %v510
  %v515 = vld [vmem:[%s4] sm:$0xf]
  %v516 = vld [vmem:[%s4 + $0x4] sm:$0xf]
  %v517 = vld [vmem:[%s4 + $0x8] sm:$0xf]
  %v518 = vld [vmem:[%s4 + $0xc] sm:$0xf]
  %v519 = vld [vmem:[%s4 + $0x10] sm:$0xf]
  %v520 = vld [vmem:[%s4 + $0x14] sm:$0xf]
  %v521 = vld [vmem:[%s4 + $0x18] sm:$0xf]
  %v522 = vld [vmem:[%s4 + $0x1c] sm:$0xf]
  %v523 = vld [vmem:[%s4 + $0x20] sm:$0xf]
  %v524 = vld [vmem:[%s4 + $0x24] sm:$0xf]
  %v525 = vld [vmem:[%s4 + $0x28] sm:$0xf]
  %v526 = vld [vmem:[%s4 + $0x2c] sm:$0xf]
  %v527 = vld [vmem:[%s4 + $0x30] sm:$0xf]
  %v528 = vld [vmem:[%s4 + $0x34] sm:$0xf]
  %v529 = vld [vmem:[%s4 + $0x38] sm:$0xf]
  %v530 = vld [vmem:[%s4 + $0x3c] sm:$0xf]
  %v531 = vld [vmem:[%s4 + $0x40] sm:$0xf]
  %v532 = vld [vmem:[%s4 + $0x44] sm:$0xf]
  %v533 = vld [vmem:[%s4 + $0x48] sm:$0xf]
  %v534 = vld [vmem:[%s4 + $0x4c] sm:$0xf]
  %v535 = vld [vmem:[%s4 + $0x50] sm:$0xf]
  %v536 = vld [vmem:[%s4 + $0x54] sm:$0xf]
  %v537 = vld [vmem:[%s4 + $0x58] sm:$0xf]
  %v538 = vld [vmem:[%s4 + $0x5c] sm:$0xf]
  %v539 = vld [vmem:[%s6] sm:$0x1]
  %v541 = vlaneseq
  %v542 = vshrl.u32 %v541, 7
  %v543 = vsub.s32 0, %v542
  %v544 = vrot.slane %v539, %v543
  %v570 = vunpack.c.l.b16 %v515
  %v571 = vunpack.c.l.b16 %v516
  %v572 = vunpack.c.l.b16 %v517
  %v573 = vunpack.c.l.b16 %v518
  %v574 = vunpack.c.l.b16 %v519
  %v575 = vunpack.c.l.b16 %v520
  %v576 = vunpack.c.l.b16 %v521
  %v577 = vunpack.c.l.b16 %v522
  %v578 = vunpack.c.l.b16 %v523
  %v579 = vunpack.c.l.b16 %v524
  %v580 = vunpack.c.l.b16 %v525
  %v581 = vunpack.c.l.b16 %v526
  %v582 = vunpack.c.l.b16 %v527
  %v583 = vunpack.c.l.b16 %v528
  %v584 = vunpack.c.l.b16 %v529
  %v585 = vunpack.c.l.b16 %v530
  %v586 = vunpack.c.l.b16 %v531
  %v587 = vunpack.c.l.b16 %v532
  %v588 = vunpack.c.l.b16 %v533
  %v589 = vunpack.c.l.b16 %v534
  %v590 = vunpack.c.l.b16 %v535
  %v591 = vunpack.c.l.b16 %v536
  %v592 = vunpack.c.l.b16 %v537
  %v593 = vunpack.c.l.b16 %v538
  %v594 = vpack.c.b16 %v571, %v570
  %v595 = vpack.c.b16 %v573, %v572
  %v596 = vpack.c.b16 %v575, %v574
  %v597 = vpack.c.b16 %v577, %v576
  %v598 = vpack.c.b16 %v579, %v578
  %v599 = vpack.c.b16 %v581, %v580
  %v600 = vpack.c.b16 %v583, %v582
  %v601 = vpack.c.b16 %v585, %v584
  %v602 = vpack.c.b16 %v587, %v586
  %v603 = vpack.c.b16 %v589, %v588
  %v604 = vpack.c.b16 %v591, %v590
  %v605 = vpack.c.b16 %v593, %v592
  %v619 = vsel %vm153, %v487, 0
  %v622 = vsel %vm153, %v507, 0
  %624 = vmatprep.subr.bf16.mxu0 0
  %625 = vmatpush1.bf16.msra.mxu0 %v594
  %626 = vmatprep.subr.bf16.mxu0 0
  %627 = vmatpush1.bf16.msra.mxu0 %v595
  %628 = vmatprep.subr.bf16.mxu0 0
  %629 = vmatpush1.bf16.msra.mxu0 %v596
  %630 = vmatprep.subr.bf16.mxu0 0
  %631 = vmatpush1.bf16.msra.mxu0 %v597
  %632 = vmatprep.subr.bf16.mxu0 0
  %633 = vmatpush1.bf16.msra.mxu0 %v598
  %634 = vmatprep.subr.bf16.mxu0 0
  %635 = vmatpush1.bf16.msra.mxu0 %v599
  %636 = vmatprep.subr.bf16.mxu0 0
  %637 = vmatpush1.bf16.msra.mxu0 %v600
  %638 = vmatprep.subr.bf16.mxu0 0
  %639 = vmatpush1.bf16.msra.mxu0 %v601
  %640 = vmatprep.subr.bf16.mxu0 0
  %641 = vmatpush1.bf16.msra.mxu0 %v602
  %642 = vmatprep.subr.bf16.mxu0 0
  %643 = vmatpush1.bf16.msra.mxu0 %v603
  %644 = vmatprep.subr.bf16.mxu0 0
  %645 = vmatpush1.bf16.msra.mxu0 %v604
  %646 = vmatprep.subr.bf16.mxu0 0
  %647 = vmatpush1.bf16.msra.mxu0 %v605
  %648 = vmatprep.subr.bf16.mxu0 0
  %649 = vmatpush1.bf16.msra.mxu0 0
  %650 = vmatprep.subr.bf16.mxu0 0
  %651 = vmatpush1.bf16.msra.mxu0 0
  %652 = vmatprep.subr.bf16.mxu0 0
  %653 = vmatpush1.bf16.msra.mxu0 0
  %654 = vmatprep.subr.bf16.mxu0 0
  %655 = vmatpush1.bf16.msra.mxu0 0
  %656 = vmatprep.mubr.bf16.mxu0 %v619
  %657 = vmatmul.mubr.bf16.gmra.mrb[0].mxu0 %v493
  %v658 = vpop.f32.mrb[0].mxu0
  %v659 = vadd.f32 %v544, %v658
  %v660 = vpop.f32.mrb[0].mxu0
  %v661 = vpop.f32.mrb[0].mxu0
  %v662 = vadd.f32 %v544, %v661
  %v663 = vpop.f32.mrb[0].mxu0
  %664 = vmatprep.mubr.bf16.mxu0 %v622
  %665 = vmatmul.mubr.bf16.gmra.mrb[0].mxu0 %v513
  %v666 = vpop.f32.mrb[0].mxu0
  %v667 = vadd.f32 %v544, %v666
  %v668 = vpop.f32.mrb[0].mxu0
  %v669 = vpop.f32.mrb[0].mxu0
  %v670 = vadd.f32 %v544, %v669
  %v671 = vpop.f32.mrb[0].mxu0
  %672 = vdwg.mxu0
  %v673 = vmax.f32 %v659, 0.0
  %v674 = vmax.f32 %v662, 0.0
  %v675 = vmax.f32 %v667, 0.0
  %v676 = vmax.f32 %v670, 0.0
  %677 = vst [vmem:[%s7] sm:$0xff] %v673
  %678 = vst [vmem:[%s7 + $0x8] sm:$0xff] %v674
  %s679 = scalar_lea.vmem %s7, 16
  %680 = vst [vmem:[%s679] sm:$0xff] %v675
  %681 = vst [vmem:[%s679 + $0x8] sm:$0xff] %v676
  // Predicated region
  $region30: #{a_call__.1} parent=0 // pred_check
    _
  $region31: #{a_call__.1} parent=0 // pred_check_branch
    %683 = sbr.rel (0) target = $region33
  $region32: #{a_call__.1} parent=0 // pred_region
    _
  $region33: #{a_call__.1} parent=0 // pred_fallthru
    _
  // Predicated region
  $region34: #{a_call__.1} parent=0 // pred_check
    _
  $region35: #{a_call__.1} parent=0 // pred_check_branch
    %685 = sbr.rel (0) target = $region37
  $region36: #{a_call__.1} parent=0 // pred_region
    _
  $region37: #{a_call__.1} parent=0 // pred_fallthru
    _

</llo_original>
